<compile_context>
chip_gen: v7x
topology: tpu7x:2x2x1
jax: 0.10.0
libtpu: 0.0.40
codegen_flags: <defaults>
</compile_context>

<pallas_src>
import jax
import jax.numpy as jnp
from jax.experimental import pallas as pl
from jax.experimental.pallas import tpu as pltpu


def _round_up(n: int, m: int) -> int:
    return ((n + m - 1) // m) * m


def new_rnn_forward(x, w_ih, w_hh, b_ih, b_hh, h0):
    """x: (T, B, I) time-major; returns final hidden state (B, H).

    Semantics: h_{t+1} = relu(x_t @ W_ih^T + b_ih + h_t @ W_hh^T + b_hh), T steps.
    """
    T, B, I = x.shape
    H = w_ih.shape[0]

    f32 = jnp.float32
    x = jnp.asarray(x, f32)
    w_ih = jnp.asarray(w_ih, f32)
    w_hh = jnp.asarray(w_hh, f32)
    b = jnp.asarray(b_ih, f32) + jnp.asarray(b_hh, f32)   # fused bias
    h0 = jnp.asarray(h0, f32)

    # Lane/sublane-dense padded sizes.  Ia = I + 1: a ones column is appended
    # to x and a bias row to W_ih^T so the bias rides the projection matmul.
    Bp = _round_up(B, 8)
    Ia = I + 1
    Ip = _round_up(Ia, 128)
    Hp = _round_up(H, 128)

    # x augmented with a ones column, then zero-padded.  Padded batch rows get
    # a ZERO in the ones column, so (with zero-padded weights and h0) they stay
    # exactly zero through the whole recurrence — no contamination even if a
    # future in-kernel reduction over the batch axis were added.
    ones = jnp.ones((T, B, 1), f32)
    x_aug = jnp.concatenate([x, ones], axis=-1)                     # (T, B, I+1)
    x_p = jnp.pad(x_aug, ((0, 0), (0, Bp - B), (0, Ip - Ia))).reshape(T * Bp, Ip)

    # W_ih^T with the fused-bias row appended, then zero-padded.  Zero-padded
    # hidden columns + zero-padded W_hh columns keep padded hidden lanes zero.
    wih_aug = jnp.concatenate([w_ih.T, b.reshape(1, H)], axis=0)    # (I+1, H)
    wih_p = jnp.pad(wih_aug, ((0, Ip - Ia), (0, Hp - H)))           # (Ip, Hp)
    whh_p = jnp.pad(w_hh.T, ((0, Hp - H), (0, Hp - H)))             # (Hp, Hp)
    h0_p = jnp.pad(h0, ((0, Bp - B), (0, Hp - H)))                  # (Bp, Hp)

    def kernel(x_ref, wih_ref, whh_ref, h0_ref, out_ref):
        # Hoisted input projection (bias already folded in): one MXU pass over
        # all T timesteps.  Result stays in vregs (T*Bp x Hp f32 = 12 vregs).
        xw = jnp.dot(x_ref[...], wih_ref[...], preferred_element_type=jnp.float32)

        # Loop-invariant recurrent weights, read once and hoisted.
        whh = whh_ref[...]

        # Fully (statically) unrolled serial recurrence; only h @ W_hh^T is on
        # the dependence chain, and the per-step xw slice is a static vreg pick.
        h = h0_ref[...]
        for t in range(T):
            pre = xw[t * Bp:(t + 1) * Bp, :] + jnp.dot(
                h, whh, preferred_element_type=jnp.float32
            )
            h = jnp.maximum(pre, 0.0)   # nonlinearity='relu'

        out_ref[...] = h

    cost = pl.CostEstimate(
        flops=2 * T * Bp * Ip * Hp + 2 * T * Bp * Hp * Hp,
        transcendentals=0,
        bytes_accessed=4 * (T * Bp * Ip + Ip * Hp + Hp * Hp + 2 * Bp * Hp),
    )

    out_p = pl.pallas_call(
        kernel,
        out_shape=jax.ShapeDtypeStruct((Bp, Hp), jnp.float32),
        grid_spec=pltpu.PrefetchScalarGridSpec(
            num_scalar_prefetch=0,
            grid=(1,),  # single kernel invocation; recurrence lives in-body
            in_specs=[
                pl.BlockSpec((T * Bp, Ip), lambda i: (0, 0)),  # x (flattened, +ones col)
                pl.BlockSpec((Ip, Hp), lambda i: (0, 0)),      # W_ih^T (+bias row)
                pl.BlockSpec((Hp, Hp), lambda i: (0, 0)),      # W_hh^T
                pl.BlockSpec((Bp, Hp), lambda i: (0, 0)),      # h0
            ],
            out_specs=pl.BlockSpec((Bp, Hp), lambda i: (0, 0)),
        ),
        compiler_params=pltpu.CompilerParams(
            dimension_semantics=("arbitrary",),
        ),
        cost_estimate=cost,
    )(x_p, wih_p, whh_p, h0_p)

    return out_p[:B, :H]


def _reference(x, w_ih, w_hh, b_ih, b_hh, h0):
    h = h0
    for t in range(x.shape[0]):
        h = jnp.maximum(x[t] @ w_ih.T + b_ih + h @ w_hh.T + b_hh, 0.0)
    return h


if __name__ == "__main__":
    # Module constants: the forward loop fixes the sequence length at 12.
    T = 12
    batch_size = 2
    n_inputs = 20
    n_neurons = 20

    key = jax.random.PRNGKey(0)
    kx, kh, k1, k2, k3, k4 = jax.random.split(key, 6)

    # Deterministic synthetic parameters (PyTorch RNNCell init: U(-1/sqrt(H), 1/sqrt(H))).
    bound = 1.0 / jnp.sqrt(jnp.float32(n_neurons))
    w_ih = jax.random.uniform(k1, (n_neurons, n_inputs), jnp.float32, -bound, bound)
    w_hh = jax.random.uniform(k2, (n_neurons, n_neurons), jnp.float32, -bound, bound)
    b_ih = jax.random.uniform(k3, (n_neurons,), jnp.float32, -bound, bound)
    b_hh = jax.random.uniform(k4, (n_neurons,), jnp.float32, -bound, bound)

    # Inputs: x[i] must be (batch, n_inputs) -> time-major stack; self.hx = randn.
    x = jax.random.normal(kx, (T, batch_size, n_inputs), jnp.float32)
    h0 = jax.random.normal(kh, (batch_size, n_neurons), jnp.float32)

    out = new_rnn_forward(x, w_ih, w_hh, b_ih, b_hh, h0)
    out = jax.block_until_ready(out)

    ref = _reference(x, w_ih, w_hh, b_ih, b_hh, h0)
    assert out.shape == (batch_size, n_neurons)
    assert jnp.allclose(out, ref, atol=1e-5, rtol=1e-5)

    print("KERNEL_OK")
</pallas_src>

<mosaic_0001>
module attributes {stable_mosaic.version = 11 : i64} {
  func.func @kernel(%arg0: i32, %arg1: memref<96x128xf32, #tpu.memory_space<vmem>>, %arg2: memref<128x128xf32, #tpu.memory_space<vmem>>, %arg3: memref<128x128xf32, #tpu.memory_space<vmem>>, %arg4: memref<8x128xf32, #tpu.memory_space<vmem>>, %arg5: memref<8x128xf32, #tpu.memory_space<vmem>>) attributes {dimension_semantics = [#tpu.dimension_semantics<arbitrary>], iteration_bounds = array<i64: 1>, scalar_prefetch = 0 : i64, scratch_operands = 0 : i64, tpu.core_type = #tpu.core_type<tc>, window_params = [{pipeline_mode = #tpu.pipeline_mode<synchronous>, transform_indices = @transform_0, window_bounds = array<i64: 96, 128>}, {pipeline_mode = #tpu.pipeline_mode<synchronous>, transform_indices = @transform_1, window_bounds = array<i64: 128, 128>}, {pipeline_mode = #tpu.pipeline_mode<synchronous>, transform_indices = @transform_2, window_bounds = array<i64: 128, 128>}, {pipeline_mode = #tpu.pipeline_mode<synchronous>, transform_indices = @transform_3, window_bounds = array<i64: 8, 128>}, {pipeline_mode = #tpu.pipeline_mode<synchronous>, transform_indices = @transform_4, window_bounds = array<i64: 8, 128>}]} {
    %c0 = arith.constant 0 : index
    %c0_0 = arith.constant 0 : index
    %0 = vector.load %arg1[%c0, %c0_0] : memref<96x128xf32, #tpu.memory_space<vmem>>, vector<96x128xf32>
    %c0_1 = arith.constant 0 : index
    %c0_2 = arith.constant 0 : index
    %1 = vector.load %arg2[%c0_1, %c0_2] : memref<128x128xf32, #tpu.memory_space<vmem>>, vector<128x128xf32>
    %cst = arith.constant dense<0.000000e+00> : vector<96x128xf32>
    %2 = tpu.matmul %0, %1, %cst {dimension_numbers = #tpu.dot_dimension_numbers<[1], [0], [0], [1], [0, 0, 1, 1], [], []>} : vector<96x128xf32>, vector<128x128xf32>, vector<96x128xf32> -> vector<96x128xf32>
    %c0_3 = arith.constant 0 : index
    %c0_4 = arith.constant 0 : index
    %3 = vector.load %arg3[%c0_3, %c0_4] : memref<128x128xf32, #tpu.memory_space<vmem>>, vector<128x128xf32>
    %c0_5 = arith.constant 0 : index
    %c0_6 = arith.constant 0 : index
    %4 = vector.load %arg4[%c0_5, %c0_6] : memref<8x128xf32, #tpu.memory_space<vmem>>, vector<8x128xf32>
    %5 = vector.extract_strided_slice %2 {offsets = [0, 0], sizes = [8, 128], strides = [1, 1]} : vector<96x128xf32> to vector<8x128xf32>
    %cst_7 = arith.constant dense<0.000000e+00> : vector<8x128xf32>
    %6 = tpu.matmul %4, %3, %cst_7 {dimension_numbers = #tpu.dot_dimension_numbers<[1], [0], [0], [1], [0, 0, 1, 1], [], []>} : vector<8x128xf32>, vector<128x128xf32>, vector<8x128xf32> -> vector<8x128xf32>
    %7 = arith.addf %5, %6 : vector<8x128xf32>
    %cst_8 = arith.constant 0.000000e+00 : f32
    %8 = vector.broadcast %cst_8 : f32 to vector<8x128xf32>
    %9 = arith.maximumf %7, %8 : vector<8x128xf32>
    %10 = vector.extract_strided_slice %2 {offsets = [8, 0], sizes = [8, 128], strides = [1, 1]} : vector<96x128xf32> to vector<8x128xf32>
    %cst_9 = arith.constant dense<0.000000e+00> : vector<8x128xf32>
    %11 = tpu.matmul %9, %3, %cst_9 {dimension_numbers = #tpu.dot_dimension_numbers<[1], [0], [0], [1], [0, 0, 1, 1], [], []>} : vector<8x128xf32>, vector<128x128xf32>, vector<8x128xf32> -> vector<8x128xf32>
    %12 = arith.addf %10, %11 : vector<8x128xf32>
    %cst_10 = arith.constant 0.000000e+00 : f32
    %13 = vector.broadcast %cst_10 : f32 to vector<8x128xf32>
    %14 = arith.maximumf %12, %13 : vector<8x128xf32>
    %15 = vector.extract_strided_slice %2 {offsets = [16, 0], sizes = [8, 128], strides = [1, 1]} : vector<96x128xf32> to vector<8x128xf32>
    %cst_11 = arith.constant dense<0.000000e+00> : vector<8x128xf32>
    %16 = tpu.matmul %14, %3, %cst_11 {dimension_numbers = #tpu.dot_dimension_numbers<[1], [0], [0], [1], [0, 0, 1, 1], [], []>} : vector<8x128xf32>, vector<128x128xf32>, vector<8x128xf32> -> vector<8x128xf32>
    %17 = arith.addf %15, %16 : vector<8x128xf32>
    %cst_12 = arith.constant 0.000000e+00 : f32
    %18 = vector.broadcast %cst_12 : f32 to vector<8x128xf32>
    %19 = arith.maximumf %17, %18 : vector<8x128xf32>
    %20 = vector.extract_strided_slice %2 {offsets = [24, 0], sizes = [8, 128], strides = [1, 1]} : vector<96x128xf32> to vector<8x128xf32>
    %cst_13 = arith.constant dense<0.000000e+00> : vector<8x128xf32>
    %21 = tpu.matmul %19, %3, %cst_13 {dimension_numbers = #tpu.dot_dimension_numbers<[1], [0], [0], [1], [0, 0, 1, 1], [], []>} : vector<8x128xf32>, vector<128x128xf32>, vector<8x128xf32> -> vector<8x128xf32>
    %22 = arith.addf %20, %21 : vector<8x128xf32>
    %cst_14 = arith.constant 0.000000e+00 : f32
    %23 = vector.broadcast %cst_14 : f32 to vector<8x128xf32>
    %24 = arith.maximumf %22, %23 : vector<8x128xf32>
    %25 = vector.extract_strided_slice %2 {offsets = [32, 0], sizes = [8, 128], strides = [1, 1]} : vector<96x128xf32> to vector<8x128xf32>
    %cst_15 = arith.constant dense<0.000000e+00> : vector<8x128xf32>
    %26 = tpu.matmul %24, %3, %cst_15 {dimension_numbers = #tpu.dot_dimension_numbers<[1], [0], [0], [1], [0, 0, 1, 1], [], []>} : vector<8x128xf32>, vector<128x128xf32>, vector<8x128xf32> -> vector<8x128xf32>
    %27 = arith.addf %25, %26 : vector<8x128xf32>
    %cst_16 = arith.constant 0.000000e+00 : f32
    %28 = vector.broadcast %cst_16 : f32 to vector<8x128xf32>
    %29 = arith.maximumf %27, %28 : vector<8x128xf32>
    %30 = vector.extract_strided_slice %2 {offsets = [40, 0], sizes = [8, 128], strides = [1, 1]} : vector<96x128xf32> to vector<8x128xf32>
    %cst_17 = arith.constant dense<0.000000e+00> : vector<8x128xf32>
    %31 = tpu.matmul %29, %3, %cst_17 {dimension_numbers = #tpu.dot_dimension_numbers<[1], [0], [0], [1], [0, 0, 1, 1], [], []>} : vector<8x128xf32>, vector<128x128xf32>, vector<8x128xf32> -> vector<8x128xf32>
    %32 = arith.addf %30, %31 : vector<8x128xf32>
    %cst_18 = arith.constant 0.000000e+00 : f32
    %33 = vector.broadcast %cst_18 : f32 to vector<8x128xf32>
    %34 = arith.maximumf %32, %33 : vector<8x128xf32>
    %35 = vector.extract_strided_slice %2 {offsets = [48, 0], sizes = [8, 128], strides = [1, 1]} : vector<96x128xf32> to vector<8x128xf32>
    %cst_19 = arith.constant dense<0.000000e+00> : vector<8x128xf32>
    %36 = tpu.matmul %34, %3, %cst_19 {dimension_numbers = #tpu.dot_dimension_numbers<[1], [0], [0], [1], [0, 0, 1, 1], [], []>} : vector<8x128xf32>, vector<128x128xf32>, vector<8x128xf32> -> vector<8x128xf32>
    %37 = arith.addf %35, %36 : vector<8x128xf32>
    %cst_20 = arith.constant 0.000000e+00 : f32
    %38 = vector.broadcast %cst_20 : f32 to vector<8x128xf32>
    %39 = arith.maximumf %37, %38 : vector<8x128xf32>
    %40 = vector.extract_strided_slice %2 {offsets = [56, 0], sizes = [8, 128], strides = [1, 1]} : vector<96x128xf32> to vector<8x128xf32>
    %cst_21 = arith.constant dense<0.000000e+00> : vector<8x128xf32>
    %41 = tpu.matmul %39, %3, %cst_21 {dimension_numbers = #tpu.dot_dimension_numbers<[1], [0], [0], [1], [0, 0, 1, 1], [], []>} : vector<8x128xf32>, vector<128x128xf32>, vector<8x128xf32> -> vector<8x128xf32>
    %42 = arith.addf %40, %41 : vector<8x128xf32>
    %cst_22 = arith.constant 0.000000e+00 : f32
    %43 = vector.broadcast %cst_22 : f32 to vector<8x128xf32>
    %44 = arith.maximumf %42, %43 : vector<8x128xf32>
    %45 = vector.extract_strided_slice %2 {offsets = [64, 0], sizes = [8, 128], strides = [1, 1]} : vector<96x128xf32> to vector<8x128xf32>
    %cst_23 = arith.constant dense<0.000000e+00> : vector<8x128xf32>
    %46 = tpu.matmul %44, %3, %cst_23 {dimension_numbers = #tpu.dot_dimension_numbers<[1], [0], [0], [1], [0, 0, 1, 1], [], []>} : vector<8x128xf32>, vector<128x128xf32>, vector<8x128xf32> -> vector<8x128xf32>
    %47 = arith.addf %45, %46 : vector<8x128xf32>
    %cst_24 = arith.constant 0.000000e+00 : f32
    %48 = vector.broadcast %cst_24 : f32 to vector<8x128xf32>
    %49 = arith.maximumf %47, %48 : vector<8x128xf32>
    %50 = vector.extract_strided_slice %2 {offsets = [72, 0], sizes = [8, 128], strides = [1, 1]} : vector<96x128xf32> to vector<8x128xf32>
    %cst_25 = arith.constant dense<0.000000e+00> : vector<8x128xf32>
    %51 = tpu.matmul %49, %3, %cst_25 {dimension_numbers = #tpu.dot_dimension_numbers<[1], [0], [0], [1], [0, 0, 1, 1], [], []>} : vector<8x128xf32>, vector<128x128xf32>, vector<8x128xf32> -> vector<8x128xf32>
    %52 = arith.addf %50, %51 : vector<8x128xf32>
    %cst_26 = arith.constant 0.000000e+00 : f32
    %53 = vector.broadcast %cst_26 : f32 to vector<8x128xf32>
    %54 = arith.maximumf %52, %53 : vector<8x128xf32>
    %55 = vector.extract_strided_slice %2 {offsets = [80, 0], sizes = [8, 128], strides = [1, 1]} : vector<96x128xf32> to vector<8x128xf32>
    %cst_27 = arith.constant dense<0.000000e+00> : vector<8x128xf32>
    %56 = tpu.matmul %54, %3, %cst_27 {dimension_numbers = #tpu.dot_dimension_numbers<[1], [0], [0], [1], [0, 0, 1, 1], [], []>} : vector<8x128xf32>, vector<128x128xf32>, vector<8x128xf32> -> vector<8x128xf32>
    %57 = arith.addf %55, %56 : vector<8x128xf32>
    %cst_28 = arith.constant 0.000000e+00 : f32
    %58 = vector.broadcast %cst_28 : f32 to vector<8x128xf32>
    %59 = arith.maximumf %57, %58 : vector<8x128xf32>
    %60 = vector.extract_strided_slice %2 {offsets = [88, 0], sizes = [8, 128], strides = [1, 1]} : vector<96x128xf32> to vector<8x128xf32>
    %cst_29 = arith.constant dense<0.000000e+00> : vector<8x128xf32>
    %61 = tpu.matmul %59, %3, %cst_29 {dimension_numbers = #tpu.dot_dimension_numbers<[1], [0], [0], [1], [0, 0, 1, 1], [], []>} : vector<8x128xf32>, vector<128x128xf32>, vector<8x128xf32> -> vector<8x128xf32>
    %62 = arith.addf %60, %61 : vector<8x128xf32>
    %cst_30 = arith.constant 0.000000e+00 : f32
    %63 = vector.broadcast %cst_30 : f32 to vector<8x128xf32>
    %64 = arith.maximumf %62, %63 : vector<8x128xf32>
    %c0_31 = arith.constant 0 : index
    %c0_32 = arith.constant 0 : index
    %65 = vector.load %arg5[%c0_31, %c0_32] : memref<8x128xf32, #tpu.memory_space<vmem>>, vector<8x128xf32>
    tpu.vector_store %arg5[%c0_31, %c0_32], %64 {strides = array<i32>} : memref<8x128xf32, #tpu.memory_space<vmem>>, vector<8x128xf32>,
    return
  }
  func.func @transform_0(%arg0: i32) -> (i32, i32) {
    %c0_i32 = arith.constant 0 : i32
    %c0_i32_0 = arith.constant 0 : i32
    %c0_i32_1 = arith.constant 0 : i32
    return %c0_i32, %c0_i32_0 : i32, i32
  }
  func.func @transform_1(%arg0: i32) -> (i32, i32) {
    %c0_i32 = arith.constant 0 : i32
    %c0_i32_0 = arith.constant 0 : i32
    %c0_i32_1 = arith.constant 0 : i32
    return %c0_i32, %c0_i32_0 : i32, i32
  }
  func.func @transform_2(%arg0: i32) -> (i32, i32) {
    %c0_i32 = arith.constant 0 : i32
    %c0_i32_0 = arith.constant 0 : i32
    %c0_i32_1 = arith.constant 0 : i32
    return %c0_i32, %c0_i32_0 : i32, i32
  }
  func.func @transform_3(%arg0: i32) -> (i32, i32) {
    %c0_i32 = arith.constant 0 : i32
    %c0_i32_0 = arith.constant 0 : i32
    %c0_i32_1 = arith.constant 0 : i32
    return %c0_i32, %c0_i32_0 : i32, i32
  }
  func.func @transform_4(%arg0: i32) -> (i32, i32) {
    %c0_i32 = arith.constant 0 : i32
    %c0_i32_0 = arith.constant 0 : i32
    %c0_i32_1 = arith.constant 0 : i32
    return %c0_i32, %c0_i32_0 : i32, i32
  }
}

</mosaic_0001>

<llo_original>
// kernel: tpu_custom_call.1
$region0: #{tpu_custom_call.1}
  #allocation0 [shape = 'u32[]', space=smem, size = 0x4, offset = 0x4, fixed_abs, tag = 'smem constant byte address 0x4 - core index']
  #allocation1 [shape = 'u32[144,128]{1,0:T(1,128)}', space=vmem, size = 0x12000, scoped, tag = 'internal scratch']
  %s0 = inlined_call_operand.hbm [shape: f32[96,128], index: 0, kind: input, shape index: {}]
  %s1 = inlined_call_operand.hbm [shape: f32[128,128], index: 1, kind: input, shape index: {}]
  %s2 = inlined_call_operand.hbm [shape: f32[128,128], index: 2, kind: input, shape index: {}]
  %s3 = inlined_call_operand.vmem [shape: f32[8,128], index: 3, kind: input, shape index: {}]
  %s4 = inlined_call_operand.hbm [shape: f32[8,128], index: 4, kind: output, shape index: {}]
  %s5 = sld [smem:[#allocation0]]
  $region38: #{tpu_custom_call.1} parent=0
    _
  %s7 = ssub.s32 1, %s5
  %s8 = scalar_select 0, %s7, %s5
  $region1: #{tpu_custom_call.1} parent=0
    #allocation2 [shape = 'u8[49152]{0}', space=vmem, size = 0xc000, scoped, tag = 'input window, operand 0, single buffered']
    #allocation3 [shape = 's32[1]{0}', space=sflag, size = 0x4, scoped, tag = 'scoped memory for tpu_custom_call.1']
    #allocation4 [shape = 's32[1]{0}', space=sflag, size = 0x4, scoped, tag = 'scoped memory for tpu_custom_call.1']
    #allocation5 [shape = 'u8[65536]{0}', space=vmem, size = 0x10000, scoped, tag = 'input window, operand 1, single buffered']
    #allocation6 [shape = 's32[1]{0}', space=sflag, size = 0x4, scoped, tag = 'scoped memory for tpu_custom_call.1']
    #allocation7 [shape = 'u8[65536]{0}', space=vmem, size = 0x10000, scoped, tag = 'input window, operand 2, single buffered']
    #allocation8 [shape = 'u8[4096]{0}', space=vmem, size = 0x1000, scoped, tag = 'output window, operand 0, single buffered']
    %9 = vsyncpa [#allocation3], 0
    %10 = vsyncpa [#allocation6], 0
    %11 = vsyncpa [#allocation4], 0
    // Predicated region
    $region2: #{tpu_custom_call.1} parent=1 // pred_check
      _
    $region3: #{tpu_custom_call.1} parent=1 // pred_check_branch
      %13 = sbr.rel (0) target = $region5
    $region4: #{tpu_custom_call.1} parent=1 // pred_region
      %s15 = ssub.s32 1536, 1536
      %16 = vsyncadd [#allocation3], %s15
      %s17 = sshll.u32 [#allocation2], 4
      %s18 = int_to_ptr.vmem [resolvable:$true] %s17
      %23 = dma.hbm_to_vmem [thread:$0]  %s0, 1536, %s18, [#allocation3], 128, 128, 8
    $region5: #{tpu_custom_call.1} parent=1 // pred_fallthru
      _
    // Predicated region
    $region6: #{tpu_custom_call.1} parent=1 // pred_check
      _
    $region7: #{tpu_custom_call.1} parent=1 // pred_check_branch
      %25 = sbr.rel (0) target = $region9
    $region8: #{tpu_custom_call.1} parent=1 // pred_region
      %s27 = ssub.s32 2048, 2048
      %28 = vsyncadd [#allocation6], %s27
      %s29 = sshll.u32 [#allocation5], 4
      %s30 = int_to_ptr.vmem [resolvable:$true] %s29
      %35 = dma.hbm_to_vmem [thread:$0]  %s1, 2048, %s30, [#allocation6], 128, 128, 8
    $region9: #{tpu_custom_call.1} parent=1 // pred_fallthru
      _
    // Predicated region
    $region10: #{tpu_custom_call.1} parent=1 // pred_check
      _
    $region11: #{tpu_custom_call.1} parent=1 // pred_check_branch
      %37 = sbr.rel (0) target = $region13
    $region12: #{tpu_custom_call.1} parent=1 // pred_region
      %s39 = ssub.s32 2048, 2048
      %40 = vsyncadd [#allocation6], %s39
      %s41 = sshll.u32 [#allocation7], 4
      %s42 = int_to_ptr.vmem [resolvable:$true] %s41
      %47 = dma.hbm_to_vmem [thread:$0]  %s2, 2048, %s42, [#allocation6], 128, 128, 8
    $region13: #{tpu_custom_call.1} parent=1 // pred_fallthru
      _
    // Predicated region
    $region14: #{tpu_custom_call.1} parent=1 // pred_check
      _
    $region15: #{tpu_custom_call.1} parent=1 // pred_check_branch
      %49 = sbr.rel (0) target = $region17
    $region16: #{tpu_custom_call.1} parent=1 // pred_region
      _
    $region17: #{tpu_custom_call.1} parent=1 // pred_fallthru
      _
    // Predicated region
    $region18: #{tpu_custom_call.1} parent=1 // pred_check
      _
    $region19: #{tpu_custom_call.1} parent=1 // pred_check_branch
      %51 = sbr.rel (0) target = $region21
    $region20: #{tpu_custom_call.1} parent=1 // pred_region
      %52 = dma.done [#allocation3], 1536
    $region21: #{tpu_custom_call.1} parent=1 // pred_fallthru
      _
    // Predicated region
    $region22: #{tpu_custom_call.1} parent=1 // pred_check
      _
    $region23: #{tpu_custom_call.1} parent=1 // pred_check_branch
      %54 = sbr.rel (0) target = $region25
    $region24: #{tpu_custom_call.1} parent=1 // pred_region
      %55 = dma.done [#allocation6], 2048
    $region25: #{tpu_custom_call.1} parent=1 // pred_fallthru
      _
    // Predicated region
    $region26: #{tpu_custom_call.1} parent=1 // pred_check
      _
    $region27: #{tpu_custom_call.1} parent=1 // pred_check_branch
      %57 = sbr.rel (0) target = $region29
    $region28: #{tpu_custom_call.1} parent=1 // pred_region
      %58 = dma.done [#allocation6], 2048
    $region29: #{tpu_custom_call.1} parent=1 // pred_fallthru
      _
    %v59 = vld [vmem:[#allocation2] sm:$0xff]
    %v60 = vld [vmem:[#allocation2 + $0x8] sm:$0xff]
    %v61 = vld [vmem:[#allocation2 + $0x10] sm:$0xff]
    %v62 = vld [vmem:[#allocation2 + $0x18] sm:$0xff]
    %v63 = vld [vmem:[#allocation2 + $0x20] sm:$0xff]
    %v64 = vld [vmem:[#allocation2 + $0x28] sm:$0xff]
    %v65 = vld [vmem:[#allocation2 + $0x30] sm:$0xff]
    %v66 = vld [vmem:[#allocation2 + $0x38] sm:$0xff]
    %v67 = vld [vmem:[#allocation2 + $0x40] sm:$0xff]
    %v68 = vld [vmem:[#allocation2 + $0x48] sm:$0xff]
    %v69 = vld [vmem:[#allocation2 + $0x50] sm:$0xff]
    %v70 = vld [vmem:[#allocation2 + $0x58] sm:$0xff]
    %v71 = vld [vmem:[#allocation5] sm:$0xff]
    %v72 = vld [vmem:[#allocation5 + $0x8] sm:$0xff]
    %v73 = vld [vmem:[#allocation5 + $0x10] sm:$0xff]
    %v74 = vld [vmem:[#allocation5 + $0x18] sm:$0xff]
    %v75 = vld [vmem:[#allocation5 + $0x20] sm:$0xff]
    %v76 = vld [vmem:[#allocation5 + $0x28] sm:$0xff]
    %v77 = vld [vmem:[#allocation5 + $0x30] sm:$0xff]
    %v78 = vld [vmem:[#allocation5 + $0x38] sm:$0xff]
    %v79 = vld [vmem:[#allocation5 + $0x40] sm:$0xff]
    %v80 = vld [vmem:[#allocation5 + $0x48] sm:$0xff]
    %v81 = vld [vmem:[#allocation5 + $0x50] sm:$0xff]
    %v82 = vld [vmem:[#allocation5 + $0x58] sm:$0xff]
    %v83 = vld [vmem:[#allocation5 + $0x60] sm:$0xff]
    %v84 = vld [vmem:[#allocation5 + $0x68] sm:$0xff]
    %v85 = vld [vmem:[#allocation5 + $0x70] sm:$0xff]
    %v86 = vld [vmem:[#allocation5 + $0x78] sm:$0xff]
    %87 = vmatprep.subr.mxu0 0.0
    %88 = vmatpush1.msra.mxu0 %v71
    %89 = vmatprep.subr.mxu0 0.0
    %90 = vmatpush1.msra.mxu0 %v72
    %91 = vmatprep.subr.mxu0 0.0
    %92 = vmatpush1.msra.mxu0 %v73
    %93 = vmatprep.subr.mxu0 0.0
    %94 = vmatpush1.msra.mxu0 %v74
    %95 = vmatprep.subr.mxu0 0.0
    %96 = vmatpush1.msra.mxu0 %v75
    %97 = vmatprep.subr.mxu0 0.0
    %98 = vmatpush1.msra.mxu0 %v76
    %99 = vmatprep.subr.mxu0 0.0
    %100 = vmatpush1.msra.mxu0 %v77
    %101 = vmatprep.subr.mxu0 0.0
    %102 = vmatpush1.msra.mxu0 %v78
    %103 = vmatprep.subr.mxu0 0.0
    %104 = vmatpush1.msra.mxu0 %v79
    %105 = vmatprep.subr.mxu0 0.0
    %106 = vmatpush1.msra.mxu0 %v80
    %107 = vmatprep.subr.mxu0 0.0
    %108 = vmatpush1.msra.mxu0 %v81
    %109 = vmatprep.subr.mxu0 0.0
    %110 = vmatpush1.msra.mxu0 %v82
    %111 = vmatprep.subr.mxu0 0.0
    %112 = vmatpush1.msra.mxu0 %v83
    %113 = vmatprep.subr.mxu0 0.0
    %114 = vmatpush1.msra.mxu0 %v84
    %115 = vmatprep.subr.mxu0 0.0
    %116 = vmatpush1.msra.mxu0 %v85
    %117 = vmatprep.subr.mxu0 0.0
    %118 = vmatpush1.msra.mxu0 %v86
    %119 = vmatprep.subr.mxu0 0.0
    %120 = vmatpush1.msra.mxu0 0.0
    %121 = vmatprep.subr.mxu0 0.0
    %122 = vmatpush1.msra.mxu0 0.0
    %123 = vmatprep.subr.mxu0 0.0
    %124 = vmatpush1.msra.mxu0 0.0
    %125 = vmatprep.subr.mxu0 0.0
    %126 = vmatpush1.msra.mxu0 0.0
    %127 = vmatprep.subr.mxu0 0.0
    %128 = vmatpush1.msra.mxu0 0.0
    %129 = vmatprep.subr.mxu0 0.0
    %130 = vmatpush1.msra.mxu0 0.0
    %131 = vmatprep.subr.mxu0 0.0
    %132 = vmatpush1.msra.mxu0 0.0
    %133 = vmatprep.subr.mxu0 0.0
    %134 = vmatpush1.msra.mxu0 0.0
    %135 = vmatprep.subr.mxu0 0.0
    %136 = vmatpush1.msra.mxu0 0.0
    %137 = vmatprep.subr.mxu0 0.0
    %138 = vmatpush1.msra.mxu0 0.0
    %139 = vmatprep.subr.mxu0 0.0
    %140 = vmatpush1.msra.mxu0 0.0
    %141 = vmatprep.subr.mxu0 0.0
    %142 = vmatpush1.msra.mxu0 0.0
    %143 = vmatprep.subr.mxu0 0.0
    %144 = vmatpush1.msra.mxu0 0.0
    %145 = vmatprep.subr.mxu0 0.0
    %146 = vmatpush1.msra.mxu0 0.0
    %147 = vmatprep.subr.mxu0 0.0
    %148 = vmatpush1.msra.mxu0 0.0
    %149 = vmatprep.subr.mxu0 0.0
    %150 = vmatpush1.msra.mxu0 0.0
    %151 = vmatprep.mubr.f32.mxu0 0.0
    %152 = vmatmul.mubr.f32.gmra.mrb[0].mxu0 %v59
    %v153 = vpop.f32.mrb[0].mxu0
    %v154 = vadd.f32 0.0, %v153
    %v155 = vpop.f32.mrb[0].mxu0
    %156 = vmatprep.mubr.f32.mxu0 0.0
    %157 = vmatmul.mubr.f32.gmra.mrb[0].mxu0 %v60
    %v158 = vpop.f32.mrb[0].mxu0
    %v159 = vadd.f32 0.0, %v158
    %v160 = vpop.f32.mrb[0].mxu0
    %161 = vmatprep.mubr.f32.mxu0 0.0
    %162 = vmatmul.mubr.f32.gmra.mrb[0].mxu0 %v61
    %v163 = vpop.f32.mrb[0].mxu0
    %v164 = vadd.f32 0.0, %v163
    %v165 = vpop.f32.mrb[0].mxu0
    %166 = vmatprep.mubr.f32.mxu0 0.0
    %167 = vmatmul.mubr.f32.gmra.mrb[0].mxu0 %v62
    %v168 = vpop.f32.mrb[0].mxu0
    %v169 = vadd.f32 0.0, %v168
    %v170 = vpop.f32.mrb[0].mxu0
    %171 = vmatprep.mubr.f32.mxu0 0.0
    %172 = vmatmul.mubr.f32.gmra.mrb[0].mxu0 %v63
    %v173 = vpop.f32.mrb[0].mxu0
    %v174 = vadd.f32 0.0, %v173
    %v175 = vpop.f32.mrb[0].mxu0
    %176 = vmatprep.mubr.f32.mxu0 0.0
    %177 = vmatmul.mubr.f32.gmra.mrb[0].mxu0 %v64
    %v178 = vpop.f32.mrb[0].mxu0
    %v179 = vadd.f32 0.0, %v178
    %v180 = vpop.f32.mrb[0].mxu0
    %181 = vmatprep.mubr.f32.mxu0 0.0
    %182 = vmatmul.mubr.f32.gmra.mrb[0].mxu0 %v65
    %v183 = vpop.f32.mrb[0].mxu0
    %v184 = vadd.f32 0.0, %v183
    %v185 = vpop.f32.mrb[0].mxu0
    %186 = vmatprep.mubr.f32.mxu0 0.0
    %187 = vmatmul.mubr.f32.gmra.mrb[0].mxu0 %v66
    %v188 = vpop.f32.mrb[0].mxu0
    %v189 = vadd.f32 0.0, %v188
    %v190 = vpop.f32.mrb[0].mxu0
    %191 = vmatprep.mubr.f32.mxu0 0.0
    %192 = vmatmul.mubr.f32.gmra.mrb[0].mxu0 %v67
    %v193 = vpop.f32.mrb[0].mxu0
    %v194 = vadd.f32 0.0, %v193
    %v195 = vpop.f32.mrb[0].mxu0
    %196 = vmatprep.mubr.f32.mxu0 0.0
    %197 = vmatmul.mubr.f32.gmra.mrb[0].mxu0 %v68
    %v198 = vpop.f32.mrb[0].mxu0
    %v199 = vadd.f32 0.0, %v198
    %v200 = vpop.f32.mrb[0].mxu0
    %201 = vmatprep.mubr.f32.mxu0 0.0
    %202 = vmatmul.mubr.f32.gmra.mrb[0].mxu0 %v69
    %v203 = vpop.f32.mrb[0].mxu0
    %v204 = vadd.f32 0.0, %v203
    %v205 = vpop.f32.mrb[0].mxu0
    %206 = vmatprep.mubr.f32.mxu0 0.0
    %207 = vmatmul.mubr.f32.gmra.mrb[0].mxu0 %v70
    %v208 = vpop.f32.mrb[0].mxu0
    %v209 = vadd.f32 0.0, %v208
    %v210 = vpop.f32.mrb[0].mxu0
    %211 = vdwg.mxu0
    %v212 = vld [vmem:[#allocation7] sm:$0xff]
    %v213 = vld [vmem:[#allocation7 + $0x8] sm:$0xff]
    %v214 = vld [vmem:[#allocation7 + $0x10] sm:$0xff]
    %v215 = vld [vmem:[#allocation7 + $0x18] sm:$0xff]
    %v216 = vld [vmem:[#allocation7 + $0x20] sm:$0xff]
    %v217 = vld [vmem:[#allocation7 + $0x28] sm:$0xff]
    %v218 = vld [vmem:[#allocation7 + $0x30] sm:$0xff]
    %v219 = vld [vmem:[#allocation7 + $0x38] sm:$0xff]
    %v220 = vld [vmem:[#allocation7 + $0x40] sm:$0xff]
    %v221 = vld [vmem:[#allocation7 + $0x48] sm:$0xff]
    %v222 = vld [vmem:[#allocation7 + $0x50] sm:$0xff]
    %v223 = vld [vmem:[#allocation7 + $0x58] sm:$0xff]
    %v224 = vld [vmem:[#allocation7 + $0x60] sm:$0xff]
    %v225 = vld [vmem:[#allocation7 + $0x68] sm:$0xff]
    %v226 = vld [vmem:[#allocation7 + $0x70] sm:$0xff]
    %v227 = vld [vmem:[#allocation7 + $0x78] sm:$0xff]
    %v228 = vld [vmem:[%s3] sm:$0xff]
    %229 = vmatprep.subr.mxu0 0.0
    %230 = vmatpush1.msra.mxu0 %v212
    %231 = vmatprep.subr.mxu0 0.0
    %232 = vmatpush1.msra.mxu0 %v213
    %233 = vmatprep.subr.mxu0 0.0
    %234 = vmatpush1.msra.mxu0 %v214
    %235 = vmatprep.subr.mxu0 0.0
    %236 = vmatpush1.msra.mxu0 %v215
    %237 = vmatprep.subr.mxu0 0.0
    %238 = vmatpush1.msra.mxu0 %v216
    %239 = vmatprep.subr.mxu0 0.0
    %240 = vmatpush1.msra.mxu0 %v217
    %241 = vmatprep.subr.mxu0 0.0
    %242 = vmatpush1.msra.mxu0 %v218
    %243 = vmatprep.subr.mxu0 0.0
    %244 = vmatpush1.msra.mxu0 %v219
    %245 = vmatprep.subr.mxu0 0.0
    %246 = vmatpush1.msra.mxu0 %v220
    %247 = vmatprep.subr.mxu0 0.0
    %248 = vmatpush1.msra.mxu0 %v221
    %249 = vmatprep.subr.mxu0 0.0
    %250 = vmatpush1.msra.mxu0 %v222
    %251 = vmatprep.subr.mxu0 0.0
    %252 = vmatpush1.msra.mxu0 %v223
    %253 = vmatprep.subr.mxu0 0.0
    %254 = vmatpush1.msra.mxu0 %v224
    %255 = vmatprep.subr.mxu0 0.0
    %256 = vmatpush1.msra.mxu0 %v225
    %257 = vmatprep.subr.mxu0 0.0
    %258 = vmatpush1.msra.mxu0 %v226
    %259 = vmatprep.subr.mxu0 0.0
    %260 = vmatpush1.msra.mxu0 %v227
    %261 = vmatprep.subr.mxu0 0.0
    %262 = vmatpush1.msra.mxu0 0.0
    %263 = vmatprep.subr.mxu0 0.0
    %264 = vmatpush1.msra.mxu0 0.0
    %265 = vmatprep.subr.mxu0 0.0
    %266 = vmatpush1.msra.mxu0 0.0
    %267 = vmatprep.subr.mxu0 0.0
    %268 = vmatpush1.msra.mxu0 0.0
    %269 = vmatprep.subr.mxu0 0.0
    %270 = vmatpush1.msra.mxu0 0.0
    %271 = vmatprep.subr.mxu0 0.0
    %272 = vmatpush1.msra.mxu0 0.0
    %273 = vmatprep.subr.mxu0 0.0
    %274 = vmatpush1.msra.mxu0 0.0
    %275 = vmatprep.subr.mxu0 0.0
    %276 = vmatpush1.msra.mxu0 0.0
    %277 = vmatprep.subr.mxu0 0.0
    %278 = vmatpush1.msra.mxu0 0.0
    %279 = vmatprep.subr.mxu0 0.0
    %280 = vmatpush1.msra.mxu0 0.0
    %281 = vmatprep.subr.mxu0 0.0
    %282 = vmatpush1.msra.mxu0 0.0
    %283 = vmatprep.subr.mxu0 0.0
    %284 = vmatpush1.msra.mxu0 0.0
    %285 = vmatprep.subr.mxu0 0.0
    %286 = vmatpush1.msra.mxu0 0.0
    %287 = vmatprep.subr.mxu0 0.0
    %288 = vmatpush1.msra.mxu0 0.0
    %289 = vmatprep.subr.mxu0 0.0
    %290 = vmatpush1.msra.mxu0 0.0
    %291 = vmatprep.subr.mxu0 0.0
    %292 = vmatpush1.msra.mxu0 0.0
    %293 = vmatprep.mubr.f32.mxu0 0.0
    %294 = vmatmul.mubr.f32.gmra.mrb[0].mxu0 %v228
    %v295 = vpop.f32.mrb[0].mxu0
    %v296 = vadd.f32 0.0, %v295
    %v297 = vpop.f32.mrb[0].mxu0
    %298 = vdwg.mxu0
    %v299 = vadd.f32 %v154, %v296
    %v300 = vmax.f32 %v299, 0.0
    %301 = vmatprep.subr.mxu0 0.0
    %302 = vmatpush1.msra.mxu0 %v212
    %303 = vmatprep.subr.mxu0 0.0
    %304 = vmatpush1.msra.mxu0 %v213
    %305 = vmatprep.subr.mxu0 0.0
    %306 = vmatpush1.msra.mxu0 %v214
    %307 = vmatprep.subr.mxu0 0.0
    %308 = vmatpush1.msra.mxu0 %v215
    %309 = vmatprep.subr.mxu0 0.0
    %310 = vmatpush1.msra.mxu0 %v216
    %311 = vmatprep.subr.mxu0 0.0
    %312 = vmatpush1.msra.mxu0 %v217
    %313 = vmatprep.subr.mxu0 0.0
    %314 = vmatpush1.msra.mxu0 %v218
    %315 = vmatprep.subr.mxu0 0.0
    %316 = vmatpush1.msra.mxu0 %v219
    %317 = vmatprep.subr.mxu0 0.0
    %318 = vmatpush1.msra.mxu0 %v220
    %319 = vmatprep.subr.mxu0 0.0
    %320 = vmatpush1.msra.mxu0 %v221
    %321 = vmatprep.subr.mxu0 0.0
    %322 = vmatpush1.msra.mxu0 %v222
    %323 = vmatprep.subr.mxu0 0.0
    %324 = vmatpush1.msra.mxu0 %v223
    %325 = vmatprep.subr.mxu0 0.0
    %326 = vmatpush1.msra.mxu0 %v224
    %327 = vmatprep.subr.mxu0 0.0
    %328 = vmatpush1.msra.mxu0 %v225
    %329 = vmatprep.subr.mxu0 0.0
    %330 = vmatpush1.msra.mxu0 %v226
    %331 = vmatprep.subr.mxu0 0.0
    %332 = vmatpush1.msra.mxu0 %v227
    %333 = vmatprep.subr.mxu0 0.0
    %334 = vmatpush1.msra.mxu0 0.0
    %335 = vmatprep.subr.mxu0 0.0
    %336 = vmatpush1.msra.mxu0 0.0
    %337 = vmatprep.subr.mxu0 0.0
    %338 = vmatpush1.msra.mxu0 0.0
    %339 = vmatprep.subr.mxu0 0.0
    %340 = vmatpush1.msra.mxu0 0.0
    %341 = vmatprep.subr.mxu0 0.0
    %342 = vmatpush1.msra.mxu0 0.0
    %343 = vmatprep.subr.mxu0 0.0
    %344 = vmatpush1.msra.mxu0 0.0
    %345 = vmatprep.subr.mxu0 0.0
    %346 = vmatpush1.msra.mxu0 0.0
    %347 = vmatprep.subr.mxu0 0.0
    %348 = vmatpush1.msra.mxu0 0.0
    %349 = vmatprep.subr.mxu0 0.0
    %350 = vmatpush1.msra.mxu0 0.0
    %351 = vmatprep.subr.mxu0 0.0
    %352 = vmatpush1.msra.mxu0 0.0
    %353 = vmatprep.subr.mxu0 0.0
    %354 = vmatpush1.msra.mxu0 0.0
    %355 = vmatprep.subr.mxu0 0.0
    %356 = vmatpush1.msra.mxu0 0.0
    %357 = vmatprep.subr.mxu0 0.0
    %358 = vmatpush1.msra.mxu0 0.0
    %359 = vmatprep.subr.mxu0 0.0
    %360 = vmatpush1.msra.mxu0 0.0
    %361 = vmatprep.subr.mxu0 0.0
    %362 = vmatpush1.msra.mxu0 0.0
    %363 = vmatprep.subr.mxu0 0.0
    %364 = vmatpush1.msra.mxu0 0.0
    %365 = vmatprep.mubr.f32.mxu0 0.0
    %366 = vmatmul.mubr.f32.gmra.mrb[0].mxu0 %v300
    %v367 = vpop.f32.mrb[0].mxu0
    %v368 = vadd.f32 0.0, %v367
    %v369 = vpop.f32.mrb[0].mxu0
    %370 = vdwg.mxu0
    %v371 = vadd.f32 %v159, %v368
    %v372 = vmax.f32 %v371, 0.0
    %373 = vmatprep.subr.mxu0 0.0
    %374 = vmatpush1.msra.mxu0 %v212
    %375 = vmatprep.subr.mxu0 0.0
    %376 = vmatpush1.msra.mxu0 %v213
    %377 = vmatprep.subr.mxu0 0.0
    %378 = vmatpush1.msra.mxu0 %v214
    %379 = vmatprep.subr.mxu0 0.0
    %380 = vmatpush1.msra.mxu0 %v215
    %381 = vmatprep.subr.mxu0 0.0
    %382 = vmatpush1.msra.mxu0 %v216
    %383 = vmatprep.subr.mxu0 0.0
    %384 = vmatpush1.msra.mxu0 %v217
    %385 = vmatprep.subr.mxu0 0.0
    %386 = vmatpush1.msra.mxu0 %v218
    %387 = vmatprep.subr.mxu0 0.0
    %388 = vmatpush1.msra.mxu0 %v219
    %389 = vmatprep.subr.mxu0 0.0
    %390 = vmatpush1.msra.mxu0 %v220
    %391 = vmatprep.subr.mxu0 0.0
    %392 = vmatpush1.msra.mxu0 %v221
    %393 = vmatprep.subr.mxu0 0.0
    %394 = vmatpush1.msra.mxu0 %v222
    %395 = vmatprep.subr.mxu0 0.0
    %396 = vmatpush1.msra.mxu0 %v223
    %397 = vmatprep.subr.mxu0 0.0
    %398 = vmatpush1.msra.mxu0 %v224
    %399 = vmatprep.subr.mxu0 0.0
    %400 = vmatpush1.msra.mxu0 %v225
    %401 = vmatprep.subr.mxu0 0.0
    %402 = vmatpush1.msra.mxu0 %v226
    %403 = vmatprep.subr.mxu0 0.0
    %404 = vmatpush1.msra.mxu0 %v227
    %405 = vmatprep.subr.mxu0 0.0
    %406 = vmatpush1.msra.mxu0 0.0
    %407 = vmatprep.subr.mxu0 0.0
    %408 = vmatpush1.msra.mxu0 0.0
    %409 = vmatprep.subr.mxu0 0.0
    %410 = vmatpush1.msra.mxu0 0.0
    %411 = vmatprep.subr.mxu0 0.0
    %412 = vmatpush1.msra.mxu0 0.0
    %413 = vmatprep.subr.mxu0 0.0
    %414 = vmatpush1.msra.mxu0 0.0
    %415 = vmatprep.subr.mxu0 0.0
    %416 = vmatpush1.msra.mxu0 0.0
    %417 = vmatprep.subr.mxu0 0.0
    %418 = vmatpush1.msra.mxu0 0.0
    %419 = vmatprep.subr.mxu0 0.0
    %420 = vmatpush1.msra.mxu0 0.0
    %421 = vmatprep.subr.mxu0 0.0
    %422 = vmatpush1.msra.mxu0 0.0
    %423 = vmatprep.subr.mxu0 0.0
    %424 = vmatpush1.msra.mxu0 0.0
    %425 = vmatprep.subr.mxu0 0.0
    %426 = vmatpush1.msra.mxu0 0.0
    %427 = vmatprep.subr.mxu0 0.0
    %428 = vmatpush1.msra.mxu0 0.0
    %429 = vmatprep.subr.mxu0 0.0
    %430 = vmatpush1.msra.mxu0 0.0
    %431 = vmatprep.subr.mxu0 0.0
    %432 = vmatpush1.msra.mxu0 0.0
    %433 = vmatprep.subr.mxu0 0.0
    %434 = vmatpush1.msra.mxu0 0.0
    %435 = vmatprep.subr.mxu0 0.0
    %436 = vmatpush1.msra.mxu0 0.0
    %437 = vmatprep.mubr.f32.mxu0 0.0
    %438 = vmatmul.mubr.f32.gmra.mrb[0].mxu0 %v372
    %v439 = vpop.f32.mrb[0].mxu0
    %v440 = vadd.f32 0.0, %v439
    %v441 = vpop.f32.mrb[0].mxu0
    %442 = vdwg.mxu0
    %v443 = vadd.f32 %v164, %v440
    %v444 = vmax.f32 %v443, 0.0
    %445 = vmatprep.subr.mxu0 0.0
    %446 = vmatpush1.msra.mxu0 %v212
    %447 = vmatprep.subr.mxu0 0.0
    %448 = vmatpush1.msra.mxu0 %v213
    %449 = vmatprep.subr.mxu0 0.0
    %450 = vmatpush1.msra.mxu0 %v214
    %451 = vmatprep.subr.mxu0 0.0
    %452 = vmatpush1.msra.mxu0 %v215
    %453 = vmatprep.subr.mxu0 0.0
    %454 = vmatpush1.msra.mxu0 %v216
    %455 = vmatprep.subr.mxu0 0.0
    %456 = vmatpush1.msra.mxu0 %v217
    %457 = vmatprep.subr.mxu0 0.0
    %458 = vmatpush1.msra.mxu0 %v218
    %459 = vmatprep.subr.mxu0 0.0
    %460 = vmatpush1.msra.mxu0 %v219
    %461 = vmatprep.subr.mxu0 0.0
    %462 = vmatpush1.msra.mxu0 %v220
    %463 = vmatprep.subr.mxu0 0.0
    %464 = vmatpush1.msra.mxu0 %v221
    %465 = vmatprep.subr.mxu0 0.0
    %466 = vmatpush1.msra.mxu0 %v222
    %467 = vmatprep.subr.mxu0 0.0
    %468 = vmatpush1.msra.mxu0 %v223
    %469 = vmatprep.subr.mxu0 0.0
    %470 = vmatpush1.msra.mxu0 %v224
    %471 = vmatprep.subr.mxu0 0.0
    %472 = vmatpush1.msra.mxu0 %v225
    %473 = vmatprep.subr.mxu0 0.0
    %474 = vmatpush1.msra.mxu0 %v226
    %475 = vmatprep.subr.mxu0 0.0
    %476 = vmatpush1.msra.mxu0 %v227
    %477 = vmatprep.subr.mxu0 0.0
    %478 = vmatpush1.msra.mxu0 0.0
    %479 = vmatprep.subr.mxu0 0.0
    %480 = vmatpush1.msra.mxu0 0.0
    %481 = vmatprep.subr.mxu0 0.0
    %482 = vmatpush1.msra.mxu0 0.0
    %483 = vmatprep.subr.mxu0 0.0
    %484 = vmatpush1.msra.mxu0 0.0
    %485 = vmatprep.subr.mxu0 0.0
    %486 = vmatpush1.msra.mxu0 0.0
    %487 = vmatprep.subr.mxu0 0.0
    %488 = vmatpush1.msra.mxu0 0.0
    %489 = vmatprep.subr.mxu0 0.0
    %490 = vmatpush1.msra.mxu0 0.0
    %491 = vmatprep.subr.mxu0 0.0
    %492 = vmatpush1.msra.mxu0 0.0
    %493 = vmatprep.subr.mxu0 0.0
    %494 = vmatpush1.msra.mxu0 0.0
    %495 = vmatprep.subr.mxu0 0.0
    %496 = vmatpush1.msra.mxu0 0.0
    %497 = vmatprep.subr.mxu0 0.0
    %498 = vmatpush1.msra.mxu0 0.0
    %499 = vmatprep.subr.mxu0 0.0
    %500 = vmatpush1.msra.mxu0 0.0
    %501 = vmatprep.subr.mxu0 0.0
    %502 = vmatpush1.msra.mxu0 0.0
    %503 = vmatprep.subr.mxu0 0.0
    %504 = vmatpush1.msra.mxu0 0.0
    %505 = vmatprep.subr.mxu0 0.0
    %506 = vmatpush1.msra.mxu0 0.0
    %507 = vmatprep.subr.mxu0 0.0
    %508 = vmatpush1.msra.mxu0 0.0
    %509 = vmatprep.mubr.f32.mxu0 0.0
    %510 = vmatmul.mubr.f32.gmra.mrb[0].mxu0 %v444
    %v511 = vpop.f32.mrb[0].mxu0
    %v512 = vadd.f32 0.0, %v511
    %v513 = vpop.f32.mrb[0].mxu0
    %514 = vdwg.mxu0
    %v515 = vadd.f32 %v169, %v512
    %v516 = vmax.f32 %v515, 0.0
    %517 = vmatprep.subr.mxu0 0.0
    %518 = vmatpush1.msra.mxu0 %v212
    %519 = vmatprep.subr.mxu0 0.0
    %520 = vmatpush1.msra.mxu0 %v213
    %521 = vmatprep.subr.mxu0 0.0
    %522 = vmatpush1.msra.mxu0 %v214
    %523 = vmatprep.subr.mxu0 0.0
    %524 = vmatpush1.msra.mxu0 %v215
    %525 = vmatprep.subr.mxu0 0.0
    %526 = vmatpush1.msra.mxu0 %v216
    %527 = vmatprep.subr.mxu0 0.0
    %528 = vmatpush1.msra.mxu0 %v217
    %529 = vmatprep.subr.mxu0 0.0
    %530 = vmatpush1.msra.mxu0 %v218
    %531 = vmatprep.subr.mxu0 0.0
    %532 = vmatpush1.msra.mxu0 %v219
    %533 = vmatprep.subr.mxu0 0.0
    %534 = vmatpush1.msra.mxu0 %v220
    %535 = vmatprep.subr.mxu0 0.0
    %536 = vmatpush1.msra.mxu0 %v221
    %537 = vmatprep.subr.mxu0 0.0
    %538 = vmatpush1.msra.mxu0 %v222
    %539 = vmatprep.subr.mxu0 0.0
    %540 = vmatpush1.msra.mxu0 %v223
    %541 = vmatprep.subr.mxu0 0.0
    %542 = vmatpush1.msra.mxu0 %v224
    %543 = vmatprep.subr.mxu0 0.0
    %544 = vmatpush1.msra.mxu0 %v225
    %545 = vmatprep.subr.mxu0 0.0
    %546 = vmatpush1.msra.mxu0 %v226
    %547 = vmatprep.subr.mxu0 0.0
    %548 = vmatpush1.msra.mxu0 %v227
    %549 = vmatprep.subr.mxu0 0.0
    %550 = vmatpush1.msra.mxu0 0.0
    %551 = vmatprep.subr.mxu0 0.0
    %552 = vmatpush1.msra.mxu0 0.0
    %553 = vmatprep.subr.mxu0 0.0
    %554 = vmatpush1.msra.mxu0 0.0
    %555 = vmatprep.subr.mxu0 0.0
    %556 = vmatpush1.msra.mxu0 0.0
    %557 = vmatprep.subr.mxu0 0.0
    %558 = vmatpush1.msra.mxu0 0.0
    %559 = vmatprep.subr.mxu0 0.0
    %560 = vmatpush1.msra.mxu0 0.0
    %561 = vmatprep.subr.mxu0 0.0
    %562 = vmatpush1.msra.mxu0 0.0
    %563 = vmatprep.subr.mxu0 0.0
    %564 = vmatpush1.msra.mxu0 0.0
    %565 = vmatprep.subr.mxu0 0.0
    %566 = vmatpush1.msra.mxu0 0.0
    %567 = vmatprep.subr.mxu0 0.0
    %568 = vmatpush1.msra.mxu0 0.0
    %569 = vmatprep.subr.mxu0 0.0
    %570 = vmatpush1.msra.mxu0 0.0
    %571 = vmatprep.subr.mxu0 0.0
    %572 = vmatpush1.msra.mxu0 0.0
    %573 = vmatprep.subr.mxu0 0.0
    %574 = vmatpush1.msra.mxu0 0.0
    %575 = vmatprep.subr.mxu0 0.0
    %576 = vmatpush1.msra.mxu0 0.0
    %577 = vmatprep.subr.mxu0 0.0
    %578 = vmatpush1.msra.mxu0 0.0
    %579 = vmatprep.subr.mxu0 0.0
    %580 = vmatpush1.msra.mxu0 0.0
    %581 = vmatprep.mubr.f32.mxu0 0.0
    %582 = vmatmul.mubr.f32.gmra.mrb[0].mxu0 %v516
    %v583 = vpop.f32.mrb[0].mxu0
    %v584 = vadd.f32 0.0, %v583
    %v585 = vpop.f32.mrb[0].mxu0
    %586 = vdwg.mxu0
    %v587 = vadd.f32 %v174, %v584
    %v588 = vmax.f32 %v587, 0.0
    %589 = vmatprep.subr.mxu0 0.0
    %590 = vmatpush1.msra.mxu0 %v212
    %591 = vmatprep.subr.mxu0 0.0
    %592 = vmatpush1.msra.mxu0 %v213
    %593 = vmatprep.subr.mxu0 0.0
    %594 = vmatpush1.msra.mxu0 %v214
    %595 = vmatprep.subr.mxu0 0.0
    %596 = vmatpush1.msra.mxu0 %v215
    %597 = vmatprep.subr.mxu0 0.0
    %598 = vmatpush1.msra.mxu0 %v216
    %599 = vmatprep.subr.mxu0 0.0
    %600 = vmatpush1.msra.mxu0 %v217
    %601 = vmatprep.subr.mxu0 0.0
    %602 = vmatpush1.msra.mxu0 %v218
    %603 = vmatprep.subr.mxu0 0.0
    %604 = vmatpush1.msra.mxu0 %v219
    %605 = vmatprep.subr.mxu0 0.0
    %606 = vmatpush1.msra.mxu0 %v220
    %607 = vmatprep.subr.mxu0 0.0
    %608 = vmatpush1.msra.mxu0 %v221
    %609 = vmatprep.subr.mxu0 0.0
    %610 = vmatpush1.msra.mxu0 %v222
    %611 = vmatprep.subr.mxu0 0.0
    %612 = vmatpush1.msra.mxu0 %v223
    %613 = vmatprep.subr.mxu0 0.0
    %614 = vmatpush1.msra.mxu0 %v224
    %615 = vmatprep.subr.mxu0 0.0
    %616 = vmatpush1.msra.mxu0 %v225
    %617 = vmatprep.subr.mxu0 0.0
    %618 = vmatpush1.msra.mxu0 %v226
    %619 = vmatprep.subr.mxu0 0.0
    %620 = vmatpush1.msra.mxu0 %v227
    %621 = vmatprep.subr.mxu0 0.0
    %622 = vmatpush1.msra.mxu0 0.0
    %623 = vmatprep.subr.mxu0 0.0
    %624 = vmatpush1.msra.mxu0 0.0
    %625 = vmatprep.subr.mxu0 0.0
    %626 = vmatpush1.msra.mxu0 0.0
    %627 = vmatprep.subr.mxu0 0.0
    %628 = vmatpush1.msra.mxu0 0.0
    %629 = vmatprep.subr.mxu0 0.0
    %630 = vmatpush1.msra.mxu0 0.0
    %631 = vmatprep.subr.mxu0 0.0
    %632 = vmatpush1.msra.mxu0 0.0
    %633 = vmatprep.subr.mxu0 0.0
    %634 = vmatpush1.msra.mxu0 0.0
    %635 = vmatprep.subr.mxu0 0.0
    %636 = vmatpush1.msra.mxu0 0.0
    %637 = vmatprep.subr.mxu0 0.0
    %638 = vmatpush1.msra.mxu0 0.0
    %639 = vmatprep.subr.mxu0 0.0
    %640 = vmatpush1.msra.mxu0 0.0
    %641 = vmatprep.subr.mxu0 0.0
    %642 = vmatpush1.msra.mxu0 0.0
    %643 = vmatprep.subr.mxu0 0.0
    %644 = vmatpush1.msra.mxu0 0.0
    %645 = vmatprep.subr.mxu0 0.0
    %646 = vmatpush1.msra.mxu0 0.0
    %647 = vmatprep.subr.mxu0 0.0
    %648 = vmatpush1.msra.mxu0 0.0
    %649 = vmatprep.subr.mxu0 0.0
    %650 = vmatpush1.msra.mxu0 0.0
    %651 = vmatprep.subr.mxu0 0.0
    %652 = vmatpush1.msra.mxu0 0.0
    %653 = vmatprep.mubr.f32.mxu0 0.0
    %654 = vmatmul.mubr.f32.gmra.mrb[0].mxu0 %v588
    %v655 = vpop.f32.mrb[0].mxu0
    %v656 = vadd.f32 0.0, %v655
    %v657 = vpop.f32.mrb[0].mxu0
    %658 = vdwg.mxu0
    %v659 = vadd.f32 %v179, %v656
    %v660 = vmax.f32 %v659, 0.0
    %661 = vmatprep.subr.mxu0 0.0
    %662 = vmatpush1.msra.mxu0 %v212
    %663 = vmatprep.subr.mxu0 0.0
    %664 = vmatpush1.msra.mxu0 %v213
    %665 = vmatprep.subr.mxu0 0.0
    %666 = vmatpush1.msra.mxu0 %v214
    %667 = vmatprep.subr.mxu0 0.0
    %668 = vmatpush1.msra.mxu0 %v215
    %669 = vmatprep.subr.mxu0 0.0
    %670 = vmatpush1.msra.mxu0 %v216
    %671 = vmatprep.subr.mxu0 0.0
    %672 = vmatpush1.msra.mxu0 %v217
    %673 = vmatprep.subr.mxu0 0.0
    %674 = vmatpush1.msra.mxu0 %v218
    %675 = vmatprep.subr.mxu0 0.0
    %676 = vmatpush1.msra.mxu0 %v219
    %677 = vmatprep.subr.mxu0 0.0
    %678 = vmatpush1.msra.mxu0 %v220
    %679 = vmatprep.subr.mxu0 0.0
    %680 = vmatpush1.msra.mxu0 %v221
    %681 = vmatprep.subr.mxu0 0.0
    %682 = vmatpush1.msra.mxu0 %v222
    %683 = vmatprep.subr.mxu0 0.0
    %684 = vmatpush1.msra.mxu0 %v223
    %685 = vmatprep.subr.mxu0 0.0
    %686 = vmatpush1.msra.mxu0 %v224
    %687 = vmatprep.subr.mxu0 0.0
    %688 = vmatpush1.msra.mxu0 %v225
    %689 = vmatprep.subr.mxu0 0.0
    %690 = vmatpush1.msra.mxu0 %v226
    %691 = vmatprep.subr.mxu0 0.0
    %692 = vmatpush1.msra.mxu0 %v227
    %693 = vmatprep.subr.mxu0 0.0
    %694 = vmatpush1.msra.mxu0 0.0
    %695 = vmatprep.subr.mxu0 0.0
    %696 = vmatpush1.msra.mxu0 0.0
    %697 = vmatprep.subr.mxu0 0.0
    %698 = vmatpush1.msra.mxu0 0.0
    %699 = vmatprep.subr.mxu0 0.0
    %700 = vmatpush1.msra.mxu0 0.0
    %701 = vmatprep.subr.mxu0 0.0
    %702 = vmatpush1.msra.mxu0 0.0
    %703 = vmatprep.subr.mxu0 0.0
    %704 = vmatpush1.msra.mxu0 0.0
    %705 = vmatprep.subr.mxu0 0.0
    %706 = vmatpush1.msra.mxu0 0.0
    %707 = vmatprep.subr.mxu0 0.0
    %708 = vmatpush1.msra.mxu0 0.0
    %709 = vmatprep.subr.mxu0 0.0
    %710 = vmatpush1.msra.mxu0 0.0
    %711 = vmatprep.subr.mxu0 0.0
    %712 = vmatpush1.msra.mxu0 0.0
    %713 = vmatprep.subr.mxu0 0.0
    %714 = vmatpush1.msra.mxu0 0.0
    %715 = vmatprep.subr.mxu0 0.0
    %716 = vmatpush1.msra.mxu0 0.0
    %717 = vmatprep.subr.mxu0 0.0
    %718 = vmatpush1.msra.mxu0 0.0
    %719 = vmatprep.subr.mxu0 0.0
    %720 = vmatpush1.msra.mxu0 0.0
    %721 = vmatprep.subr.mxu0 0.0
    %722 = vmatpush1.msra.mxu0 0.0
    %723 = vmatprep.subr.mxu0 0.0
    %724 = vmatpush1.msra.mxu0 0.0
    %725 = vmatprep.mubr.f32.mxu0 0.0
    %726 = vmatmul.mubr.f32.gmra.mrb[0].mxu0 %v660
    %v727 = vpop.f32.mrb[0].mxu0
    %v728 = vadd.f32 0.0, %v727
    %v729 = vpop.f32.mrb[0].mxu0
    %730 = vdwg.mxu0
    %v731 = vadd.f32 %v184, %v728
    %v732 = vmax.f32 %v731, 0.0
    %733 = vmatprep.subr.mxu0 0.0
    %734 = vmatpush1.msra.mxu0 %v212
    %735 = vmatprep.subr.mxu0 0.0
    %736 = vmatpush1.msra.mxu0 %v213
    %737 = vmatprep.subr.mxu0 0.0
    %738 = vmatpush1.msra.mxu0 %v214
    %739 = vmatprep.subr.mxu0 0.0
    %740 = vmatpush1.msra.mxu0 %v215
    %741 = vmatprep.subr.mxu0 0.0
    %742 = vmatpush1.msra.mxu0 %v216
    %743 = vmatprep.subr.mxu0 0.0
    %744 = vmatpush1.msra.mxu0 %v217
    %745 = vmatprep.subr.mxu0 0.0
    %746 = vmatpush1.msra.mxu0 %v218
    %747 = vmatprep.subr.mxu0 0.0
    %748 = vmatpush1.msra.mxu0 %v219
    %749 = vmatprep.subr.mxu0 0.0
    %750 = vmatpush1.msra.mxu0 %v220
    %751 = vmatprep.subr.mxu0 0.0
    %752 = vmatpush1.msra.mxu0 %v221
    %753 = vmatprep.subr.mxu0 0.0
    %754 = vmatpush1.msra.mxu0 %v222
    %755 = vmatprep.subr.mxu0 0.0
    %756 = vmatpush1.msra.mxu0 %v223
    %757 = vmatprep.subr.mxu0 0.0
    %758 = vmatpush1.msra.mxu0 %v224
    %759 = vmatprep.subr.mxu0 0.0
    %760 = vmatpush1.msra.mxu0 %v225
    %761 = vmatprep.subr.mxu0 0.0
    %762 = vmatpush1.msra.mxu0 %v226
    %763 = vmatprep.subr.mxu0 0.0
    %764 = vmatpush1.msra.mxu0 %v227
    %765 = vmatprep.subr.mxu0 0.0
    %766 = vmatpush1.msra.mxu0 0.0
    %767 = vmatprep.subr.mxu0 0.0
    %768 = vmatpush1.msra.mxu0 0.0
    %769 = vmatprep.subr.mxu0 0.0
    %770 = vmatpush1.msra.mxu0 0.0
    %771 = vmatprep.subr.mxu0 0.0
    %772 = vmatpush1.msra.mxu0 0.0
    %773 = vmatprep.subr.mxu0 0.0
    %774 = vmatpush1.msra.mxu0 0.0
    %775 = vmatprep.subr.mxu0 0.0
    %776 = vmatpush1.msra.mxu0 0.0
    %777 = vmatprep.subr.mxu0 0.0
    %778 = vmatpush1.msra.mxu0 0.0
    %779 = vmatprep.subr.mxu0 0.0
    %780 = vmatpush1.msra.mxu0 0.0
    %781 = vmatprep.subr.mxu0 0.0
    %782 = vmatpush1.msra.mxu0 0.0
    %783 = vmatprep.subr.mxu0 0.0
    %784 = vmatpush1.msra.mxu0 0.0
    %785 = vmatprep.subr.mxu0 0.0
    %786 = vmatpush1.msra.mxu0 0.0
    %787 = vmatprep.subr.mxu0 0.0
    %788 = vmatpush1.msra.mxu0 0.0
    %789 = vmatprep.subr.mxu0 0.0
    %790 = vmatpush1.msra.mxu0 0.0
    %791 = vmatprep.subr.mxu0 0.0
    %792 = vmatpush1.msra.mxu0 0.0
    %793 = vmatprep.subr.mxu0 0.0
    %794 = vmatpush1.msra.mxu0 0.0
    %795 = vmatprep.subr.mxu0 0.0
    %796 = vmatpush1.msra.mxu0 0.0
    %797 = vmatprep.mubr.f32.mxu0 0.0
    %798 = vmatmul.mubr.f32.gmra.mrb[0].mxu0 %v732
    %v799 = vpop.f32.mrb[0].mxu0
    %v800 = vadd.f32 0.0, %v799
    %v801 = vpop.f32.mrb[0].mxu0
    %802 = vdwg.mxu0
    %v803 = vadd.f32 %v189, %v800
    %v804 = vmax.f32 %v803, 0.0
    %805 = vmatprep.subr.mxu0 0.0
    %806 = vmatpush1.msra.mxu0 %v212
    %807 = vmatprep.subr.mxu0 0.0
    %808 = vmatpush1.msra.mxu0 %v213
    %809 = vmatprep.subr.mxu0 0.0
    %810 = vmatpush1.msra.mxu0 %v214
    %811 = vmatprep.subr.mxu0 0.0
    %812 = vmatpush1.msra.mxu0 %v215
    %813 = vmatprep.subr.mxu0 0.0
    %814 = vmatpush1.msra.mxu0 %v216
    %815 = vmatprep.subr.mxu0 0.0
    %816 = vmatpush1.msra.mxu0 %v217
    %817 = vmatprep.subr.mxu0 0.0
    %818 = vmatpush1.msra.mxu0 %v218
    %819 = vmatprep.subr.mxu0 0.0
    %820 = vmatpush1.msra.mxu0 %v219
    %821 = vmatprep.subr.mxu0 0.0
    %822 = vmatpush1.msra.mxu0 %v220
    %823 = vmatprep.subr.mxu0 0.0
    %824 = vmatpush1.msra.mxu0 %v221
    %825 = vmatprep.subr.mxu0 0.0
    %826 = vmatpush1.msra.mxu0 %v222
    %827 = vmatprep.subr.mxu0 0.0
    %828 = vmatpush1.msra.mxu0 %v223
    %829 = vmatprep.subr.mxu0 0.0
    %830 = vmatpush1.msra.mxu0 %v224
    %831 = vmatprep.subr.mxu0 0.0
    %832 = vmatpush1.msra.mxu0 %v225
    %833 = vmatprep.subr.mxu0 0.0
    %834 = vmatpush1.msra.mxu0 %v226
    %835 = vmatprep.subr.mxu0 0.0
    %836 = vmatpush1.msra.mxu0 %v227
    %837 = vmatprep.subr.mxu0 0.0
    %838 = vmatpush1.msra.mxu0 0.0
    %839 = vmatprep.subr.mxu0 0.0
    %840 = vmatpush1.msra.mxu0 0.0
    %841 = vmatprep.subr.mxu0 0.0
    %842 = vmatpush1.msra.mxu0 0.0
    %843 = vmatprep.subr.mxu0 0.0
    %844 = vmatpush1.msra.mxu0 0.0
    %845 = vmatprep.subr.mxu0 0.0
    %846 = vmatpush1.msra.mxu0 0.0
    %847 = vmatprep.subr.mxu0 0.0
    %848 = vmatpush1.msra.mxu0 0.0
    %849 = vmatprep.subr.mxu0 0.0
    %850 = vmatpush1.msra.mxu0 0.0
    %851 = vmatprep.subr.mxu0 0.0
    %852 = vmatpush1.msra.mxu0 0.0
    %853 = vmatprep.subr.mxu0 0.0
    %854 = vmatpush1.msra.mxu0 0.0
    %855 = vmatprep.subr.mxu0 0.0
    %856 = vmatpush1.msra.mxu0 0.0
    %857 = vmatprep.subr.mxu0 0.0
    %858 = vmatpush1.msra.mxu0 0.0
    %859 = vmatprep.subr.mxu0 0.0
    %860 = vmatpush1.msra.mxu0 0.0
    %861 = vmatprep.subr.mxu0 0.0
    %862 = vmatpush1.msra.mxu0 0.0
    %863 = vmatprep.subr.mxu0 0.0
    %864 = vmatpush1.msra.mxu0 0.0
    %865 = vmatprep.subr.mxu0 0.0
    %866 = vmatpush1.msra.mxu0 0.0
    %867 = vmatprep.subr.mxu0 0.0
    %868 = vmatpush1.msra.mxu0 0.0
    %869 = vmatprep.mubr.f32.mxu0 0.0
    %870 = vmatmul.mubr.f32.gmra.mrb[0].mxu0 %v804
    %v871 = vpop.f32.mrb[0].mxu0
    %v872 = vadd.f32 0.0, %v871
    %v873 = vpop.f32.mrb[0].mxu0
    %874 = vdwg.mxu0
    %v875 = vadd.f32 %v194, %v872
    %v876 = vmax.f32 %v875, 0.0
    %877 = vmatprep.subr.mxu0 0.0
    %878 = vmatpush1.msra.mxu0 %v212
    %879 = vmatprep.subr.mxu0 0.0
    %880 = vmatpush1.msra.mxu0 %v213
    %881 = vmatprep.subr.mxu0 0.0
    %882 = vmatpush1.msra.mxu0 %v214
    %883 = vmatprep.subr.mxu0 0.0
    %884 = vmatpush1.msra.mxu0 %v215
    %885 = vmatprep.subr.mxu0 0.0
    %886 = vmatpush1.msra.mxu0 %v216
    %887 = vmatprep.subr.mxu0 0.0
    %888 = vmatpush1.msra.mxu0 %v217
    %889 = vmatprep.subr.mxu0 0.0
    %890 = vmatpush1.msra.mxu0 %v218
    %891 = vmatprep.subr.mxu0 0.0
    %892 = vmatpush1.msra.mxu0 %v219
    %893 = vmatprep.subr.mxu0 0.0
    %894 = vmatpush1.msra.mxu0 %v220
    %895 = vmatprep.subr.mxu0 0.0
    %896 = vmatpush1.msra.mxu0 %v221
    %897 = vmatprep.subr.mxu0 0.0
    %898 = vmatpush1.msra.mxu0 %v222
    %899 = vmatprep.subr.mxu0 0.0
    %900 = vmatpush1.msra.mxu0 %v223
    %901 = vmatprep.subr.mxu0 0.0
    %902 = vmatpush1.msra.mxu0 %v224
    %903 = vmatprep.subr.mxu0 0.0
    %904 = vmatpush1.msra.mxu0 %v225
    %905 = vmatprep.subr.mxu0 0.0
    %906 = vmatpush1.msra.mxu0 %v226
    %907 = vmatprep.subr.mxu0 0.0
    %908 = vmatpush1.msra.mxu0 %v227
    %909 = vmatprep.subr.mxu0 0.0
    %910 = vmatpush1.msra.mxu0 0.0
    %911 = vmatprep.subr.mxu0 0.0
    %912 = vmatpush1.msra.mxu0 0.0
    %913 = vmatprep.subr.mxu0 0.0
    %914 = vmatpush1.msra.mxu0 0.0
    %915 = vmatprep.subr.mxu0 0.0
    %916 = vmatpush1.msra.mxu0 0.0
    %917 = vmatprep.subr.mxu0 0.0
    %918 = vmatpush1.msra.mxu0 0.0
    %919 = vmatprep.subr.mxu0 0.0
    %920 = vmatpush1.msra.mxu0 0.0
    %921 = vmatprep.subr.mxu0 0.0
    %922 = vmatpush1.msra.mxu0 0.0
    %923 = vmatprep.subr.mxu0 0.0
    %924 = vmatpush1.msra.mxu0 0.0
    %925 = vmatprep.subr.mxu0 0.0
    %926 = vmatpush1.msra.mxu0 0.0
    %927 = vmatprep.subr.mxu0 0.0
    %928 = vmatpush1.msra.mxu0 0.0
    %929 = vmatprep.subr.mxu0 0.0
    %930 = vmatpush1.msra.mxu0 0.0
    %931 = vmatprep.subr.mxu0 0.0
    %932 = vmatpush1.msra.mxu0 0.0
    %933 = vmatprep.subr.mxu0 0.0
    %934 = vmatpush1.msra.mxu0 0.0
    %935 = vmatprep.subr.mxu0 0.0
    %936 = vmatpush1.msra.mxu0 0.0
    %937 = vmatprep.subr.mxu0 0.0
    %938 = vmatpush1.msra.mxu0 0.0
    %939 = vmatprep.subr.mxu0 0.0
    %940 = vmatpush1.msra.mxu0 0.0
    %941 = vmatprep.mubr.f32.mxu0 0.0
    %942 = vmatmul.mubr.f32.gmra.mrb[0].mxu0 %v876
    %v943 = vpop.f32.mrb[0].mxu0
    %v944 = vadd.f32 0.0, %v943
    %v945 = vpop.f32.mrb[0].mxu0
    %946 = vdwg.mxu0
    %v947 = vadd.f32 %v199, %v944
    %v948 = vmax.f32 %v947, 0.0
    %949 = vmatprep.subr.mxu0 0.0
    %950 = vmatpush1.msra.mxu0 %v212
    %951 = vmatprep.subr.mxu0 0.0
    %952 = vmatpush1.msra.mxu0 %v213
    %953 = vmatprep.subr.mxu0 0.0
    %954 = vmatpush1.msra.mxu0 %v214
    %955 = vmatprep.subr.mxu0 0.0
    %956 = vmatpush1.msra.mxu0 %v215
    %957 = vmatprep.subr.mxu0 0.0
    %958 = vmatpush1.msra.mxu0 %v216
    %959 = vmatprep.subr.mxu0 0.0
    %960 = vmatpush1.msra.mxu0 %v217
    %961 = vmatprep.subr.mxu0 0.0
    %962 = vmatpush1.msra.mxu0 %v218
    %963 = vmatprep.subr.mxu0 0.0
    %964 = vmatpush1.msra.mxu0 %v219
    %965 = vmatprep.subr.mxu0 0.0
    %966 = vmatpush1.msra.mxu0 %v220
    %967 = vmatprep.subr.mxu0 0.0
    %968 = vmatpush1.msra.mxu0 %v221
    %969 = vmatprep.subr.mxu0 0.0
    %970 = vmatpush1.msra.mxu0 %v222
    %971 = vmatprep.subr.mxu0 0.0
    %972 = vmatpush1.msra.mxu0 %v223
    %973 = vmatprep.subr.mxu0 0.0
    %974 = vmatpush1.msra.mxu0 %v224
    %975 = vmatprep.subr.mxu0 0.0
    %976 = vmatpush1.msra.mxu0 %v225
    %977 = vmatprep.subr.mxu0 0.0
    %978 = vmatpush1.msra.mxu0 %v226
    %979 = vmatprep.subr.mxu0 0.0
    %980 = vmatpush1.msra.mxu0 %v227
    %981 = vmatprep.subr.mxu0 0.0
    %982 = vmatpush1.msra.mxu0 0.0
    %983 = vmatprep.subr.mxu0 0.0
    %984 = vmatpush1.msra.mxu0 0.0
    %985 = vmatprep.subr.mxu0 0.0
    %986 = vmatpush1.msra.mxu0 0.0
    %987 = vmatprep.subr.mxu0 0.0
    %988 = vmatpush1.msra.mxu0 0.0
    %989 = vmatprep.subr.mxu0 0.0
    %990 = vmatpush1.msra.mxu0 0.0
    %991 = vmatprep.subr.mxu0 0.0
    %992 = vmatpush1.msra.mxu0 0.0
    %993 = vmatprep.subr.mxu0 0.0
    %994 = vmatpush1.msra.mxu0 0.0
    %995 = vmatprep.subr.mxu0 0.0
    %996 = vmatpush1.msra.mxu0 0.0
    %997 = vmatprep.subr.mxu0 0.0
    %998 = vmatpush1.msra.mxu0 0.0
    %999 = vmatprep.subr.mxu0 0.0
    %1000 = vmatpush1.msra.mxu0 0.0
    %1001 = vmatprep.subr.mxu0 0.0
    %1002 = vmatpush1.msra.mxu0 0.0
    %1003 = vmatprep.subr.mxu0 0.0
    %1004 = vmatpush1.msra.mxu0 0.0
    %1005 = vmatprep.subr.mxu0 0.0
    %1006 = vmatpush1.msra.mxu0 0.0
    %1007 = vmatprep.subr.mxu0 0.0
    %1008 = vmatpush1.msra.mxu0 0.0
    %1009 = vmatprep.subr.mxu0 0.0
    %1010 = vmatpush1.msra.mxu0 0.0
    %1011 = vmatprep.subr.mxu0 0.0
    %1012 = vmatpush1.msra.mxu0 0.0
    %1013 = vmatprep.mubr.f32.mxu0 0.0
    %1014 = vmatmul.mubr.f32.gmra.mrb[0].mxu0 %v948
    %v1015 = vpop.f32.mrb[0].mxu0
    %v1016 = vadd.f32 0.0, %v1015
    %v1017 = vpop.f32.mrb[0].mxu0
    %1018 = vdwg.mxu0
    %v1019 = vadd.f32 %v204, %v1016
    %v1020 = vmax.f32 %v1019, 0.0
    %1021 = vmatprep.subr.mxu0 0.0
    %1022 = vmatpush1.msra.mxu0 %v212
    %1023 = vmatprep.subr.mxu0 0.0
    %1024 = vmatpush1.msra.mxu0 %v213
    %1025 = vmatprep.subr.mxu0 0.0
    %1026 = vmatpush1.msra.mxu0 %v214
    %1027 = vmatprep.subr.mxu0 0.0
    %1028 = vmatpush1.msra.mxu0 %v215
    %1029 = vmatprep.subr.mxu0 0.0
    %1030 = vmatpush1.msra.mxu0 %v216
    %1031 = vmatprep.subr.mxu0 0.0
    %1032 = vmatpush1.msra.mxu0 %v217
    %1033 = vmatprep.subr.mxu0 0.0
    %1034 = vmatpush1.msra.mxu0 %v218
    %1035 = vmatprep.subr.mxu0 0.0
    %1036 = vmatpush1.msra.mxu0 %v219
    %1037 = vmatprep.subr.mxu0 0.0
    %1038 = vmatpush1.msra.mxu0 %v220
    %1039 = vmatprep.subr.mxu0 0.0
    %1040 = vmatpush1.msra.mxu0 %v221
    %1041 = vmatprep.subr.mxu0 0.0
    %1042 = vmatpush1.msra.mxu0 %v222
    %1043 = vmatprep.subr.mxu0 0.0
    %1044 = vmatpush1.msra.mxu0 %v223
    %1045 = vmatprep.subr.mxu0 0.0
    %1046 = vmatpush1.msra.mxu0 %v224
    %1047 = vmatprep.subr.mxu0 0.0
    %1048 = vmatpush1.msra.mxu0 %v225
    %1049 = vmatprep.subr.mxu0 0.0
    %1050 = vmatpush1.msra.mxu0 %v226
    %1051 = vmatprep.subr.mxu0 0.0
    %1052 = vmatpush1.msra.mxu0 %v227
    %1053 = vmatprep.subr.mxu0 0.0
    %1054 = vmatpush1.msra.mxu0 0.0
    %1055 = vmatprep.subr.mxu0 0.0
    %1056 = vmatpush1.msra.mxu0 0.0
    %1057 = vmatprep.subr.mxu0 0.0
    %1058 = vmatpush1.msra.mxu0 0.0
    %1059 = vmatprep.subr.mxu0 0.0
    %1060 = vmatpush1.msra.mxu0 0.0
    %1061 = vmatprep.subr.mxu0 0.0
    %1062 = vmatpush1.msra.mxu0 0.0
    %1063 = vmatprep.subr.mxu0 0.0
    %1064 = vmatpush1.msra.mxu0 0.0
    %1065 = vmatprep.subr.mxu0 0.0
    %1066 = vmatpush1.msra.mxu0 0.0
    %1067 = vmatprep.subr.mxu0 0.0
    %1068 = vmatpush1.msra.mxu0 0.0
    %1069 = vmatprep.subr.mxu0 0.0
    %1070 = vmatpush1.msra.mxu0 0.0
    %1071 = vmatprep.subr.mxu0 0.0
    %1072 = vmatpush1.msra.mxu0 0.0
    %1073 = vmatprep.subr.mxu0 0.0
    %1074 = vmatpush1.msra.mxu0 0.0
    %1075 = vmatprep.subr.mxu0 0.0
    %1076 = vmatpush1.msra.mxu0 0.0
    %1077 = vmatprep.subr.mxu0 0.0
    %1078 = vmatpush1.msra.mxu0 0.0
    %1079 = vmatprep.subr.mxu0 0.0
    %1080 = vmatpush1.msra.mxu0 0.0
    %1081 = vmatprep.subr.mxu0 0.0
    %1082 = vmatpush1.msra.mxu0 0.0
    %1083 = vmatprep.subr.mxu0 0.0
    %1084 = vmatpush1.msra.mxu0 0.0
    %1085 = vmatprep.mubr.f32.mxu0 0.0
    %1086 = vmatmul.mubr.f32.gmra.mrb[0].mxu0 %v1020
    %v1087 = vpop.f32.mrb[0].mxu0
    %v1088 = vadd.f32 0.0, %v1087
    %v1089 = vpop.f32.mrb[0].mxu0
    %1090 = vdwg.mxu0
    %v1091 = vadd.f32 %v209, %v1088
    %v1092 = vmax.f32 %v1091, 0.0
    %1093 = vst [vmem:[#allocation8] sm:$0xff] %v1092
    // Predicated region
    $region30: #{tpu_custom_call.1} parent=1 // pred_check
      _
    $region31: #{tpu_custom_call.1} parent=1 // pred_check_branch
      %1095 = sbr.rel (0) target = $region33
    $region32: #{tpu_custom_call.1} parent=1 // pred_region
      %s1097 = ssub.s32 128, 128
      %1098 = vsyncadd [#allocation4], %s1097
      %s1100 = sshll.u32 [#allocation8], 4
      %s1101 = int_to_ptr.vmem [resolvable:$true] %s1100
      %1103 = dma.vmem_to_hbm [thread:$0]  %s1101, 128, %s4, [#allocation4]
    $region33: #{tpu_custom_call.1} parent=1 // pred_fallthru
      _
    // Predicated region
    $region34: #{tpu_custom_call.1} parent=1 // pred_check
      _
    $region35: #{tpu_custom_call.1} parent=1 // pred_check_branch
      %1105 = sbr.rel (0) target = $region37
    $region36: #{tpu_custom_call.1} parent=1 // pred_region
      %1106 = dma.done [#allocation4], 128
    $region37: #{tpu_custom_call.1} parent=1 // pred_fallthru
      _
    %1107 = vsyncpa [#allocation3], 1
    %1108 = vsyncpa [#allocation6], 1
    %1109 = vsyncpa [#allocation4], 1

</llo_original>
